<compile_context>
chip_gen: v6e
topology: v6e:2x2x1
jax: 0.10.0
libtpu: 0.0.40
codegen_flags: <defaults>
</compile_context>

<pallas_src>
import functools

import jax
import jax.numpy as jnp
from jax.experimental import pallas as pl
from jax.experimental.pallas import tpu as pltpu

LANE = 128
SUBLANE = 8
VMEM_LIMIT_BYTES = 32 * 1024 * 1024    # safe scoped-VMEM ceiling on v5e/v6e/v7x
FUSED_MAX_BYTES = 4 * 1024 * 1024      # per-batch (c, S) slab budget for fused path
TILE_TARGET_BYTES = 2 * 1024 * 1024    # per-tile DMA budget for the two-pass path


def _round_up(x, m):
    return (x + m - 1) // m * m


def _pick_spatial_tile(s, c, itemsize, target_bytes):
    """Lane-dense spatial tile (multiple of 128) sized from a VMEM byte budget."""
    c_pad = _round_up(c, SUBLANE)
    lanes = max(LANE, (target_bytes // (c_pad * itemsize)) // LANE * LANE)
    return min(lanes, _round_up(s, LANE))


# ----------------------- shared in-kernel gate MLP --------------------------
def _gate_from_pooled(pooled, w1t_ref, b1_ref, w2_ref, b2_ref):
    """pooled: (c, 1) f32 channel means -> (c, 1) f32 sigmoid gate (VPU only)."""
    w1t = w1t_ref[...].astype(jnp.float32)            # (c, h)
    b1 = b1_ref[...].astype(jnp.float32)               # (1, h)
    w2 = w2_ref[...].astype(jnp.float32)               # (c, h)
    b2 = b2_ref[...].astype(jnp.float32)                # (c, 1)
    hid = jnp.sum(w1t * pooled, axis=0, keepdims=True) + b1      # (1, h)
    hid = jnp.maximum(hid, 0.0)                                  # ReLU
    z = jnp.sum(w2 * hid, axis=-1, keepdims=True) + b2           # (c, 1)
    return 1.0 / (1.0 + jnp.exp(-z))                             # Sigmoid


# ----------------------- fused single-pass kernel ---------------------------
def _fused_kernel(w1t_ref, b1_ref, w2_ref, b2_ref, x_ref, o_ref, *, inv_s):
    # x_ref / o_ref: (c, s) resident slab (batch dim squeezed).
    xs = x_ref[...]
    pooled = jnp.sum(xs, axis=-1, keepdims=True, dtype=jnp.float32) * inv_s
    gate = _gate_from_pooled(pooled, w1t_ref, b1_ref, w2_ref, b2_ref)
    o_ref[...] = xs * gate.astype(xs.dtype)


# ------------- two-pass path: pass 1 (pooled sum + fused gate MLP) ----------
def _pool_gate_kernel(w1t_ref, b1_ref, w2_ref, b2_ref, x_ref, gate_ref, acc_ref,
                      *, s, s_tile, n_s, inv_s):
    # x_ref: (c, s_tile) tile.  acc_ref: (c, 128) f32 lane-parallel accumulator.
    # gate_ref: (c, 1) output, resident across the spatial grid axis.
    k = pl.program_id(1)

    @pl.when(k == 0)
    def _init():
        acc_ref[...] = jnp.zeros_like(acc_ref)

    n_chunks = s_tile // LANE

    def accumulate(vals):
        # Sum the s_tile // 128 lane-chunks with pure VPU adds (no XLU per tile).
        part = vals[:, 0:LANE]
        for j in range(1, n_chunks):
            part = part + vals[:, j * LANE:(j + 1) * LANE]
        acc_ref[...] += part

    xs = x_ref[...].astype(jnp.float32)      # (c, s_tile)
    has_tail = (s % s_tile) != 0             # static (Python) decision

    if has_tail:
        @pl.when(k < n_s - 1)
        def _body():
            accumulate(xs)

        @pl.when(k == n_s - 1)
        def _tail():
            # OOB lanes of a partial input block are undefined -> mask them.
            lane = jax.lax.broadcasted_iota(jnp.int32, xs.shape, 1)
            valid = lane < (s - k * s_tile)
            accumulate(jnp.where(valid, xs, 0.0))
    else:
        accumulate(xs)

    @pl.when(k == n_s - 1)
    def _epilogue():
        pooled = jnp.sum(acc_ref[...], axis=-1, keepdims=True) * inv_s   # (c, 1)
        gate = _gate_from_pooled(pooled, w1t_ref, b1_ref, w2_ref, b2_ref)
        gate_ref[...] = gate.astype(gate_ref.dtype)


# ------------- two-pass path: pass 2 (streaming channel rescale) ------------
def _scale_kernel(g_ref, x_ref, o_ref):
    # g_ref: (c, 1), x_ref / o_ref: (c, s_tile)
    o_ref[...] = x_ref[...] * g_ref[...]


# --------------------------------- wrapper ----------------------------------
def am_forward(x, w1, b1, w2, b2, *, fused_max_bytes=FUSED_MAX_BYTES,
               tile_target_bytes=TILE_TARGET_BYTES):
    """x: (b, c, d, h, w) -> (b, c, d, h, w). Same semantics as PyTorch AM."""
    b, c, d, hh, ww = x.shape
    s = d * hh * ww
    hidden = w1.shape[0]
    itemsize = jnp.dtype(x.dtype).itemsize
    inv_s = 1.0 / float(s)

    x_flat = x.reshape(b, c, s)
    # Lay out the tiny MLP so the kernels never transpose:
    w1t = jnp.asarray(w1).T                      # (c, hidden)
    b1r = jnp.asarray(b1).reshape(1, hidden)     # (1, hidden)
    w2m = jnp.asarray(w2)                        # (c, hidden)
    b2c = jnp.asarray(b2).reshape(c, 1)          # (c, 1)

    c_pad = _round_up(c, SUBLANE)
    s_pad = _round_up(s, LANE)
    slab_bytes = c_pad * s_pad * itemsize
    x_bytes = b * c * s * itemsize

    if slab_bytes <= fused_max_bytes:
        # ---- fused single pass: x read from HBM once, written once ---------
        out_flat = pl.pallas_call(
            functools.partial(_fused_kernel, inv_s=inv_s),
            out_shape=jax.ShapeDtypeStruct((b, c, s), x.dtype),
            grid=(b,),
            in_specs=[
                pl.BlockSpec(w1t.shape, lambda i: (0, 0)),
                pl.BlockSpec(b1r.shape, lambda i: (0, 0)),
                pl.BlockSpec(w2m.shape, lambda i: (0, 0)),
                pl.BlockSpec(b2c.shape, lambda i: (0, 0)),
                pl.BlockSpec((None, c, s), lambda i: (i, 0, 0)),
            ],
            out_specs=pl.BlockSpec((None, c, s), lambda i: (i, 0, 0)),
            compiler_params=pltpu.CompilerParams(
                dimension_semantics=("parallel",),
                vmem_limit_bytes=VMEM_LIMIT_BYTES),
            cost_estimate=pl.CostEstimate(
                flops=2 * b * c * s, transcendentals=b * c,
                bytes_accessed=2 * x_bytes),
        )(w1t, b1r, w2m, b2c, x_flat)
    else:
        s_tile = _pick_spatial_tile(s, c, itemsize, tile_target_bytes)
        n_s = pl.cdiv(s, s_tile)

        # ---- pass 1: tiled spatial sum + fused gate MLP epilogue -----------
        gate = pl.pallas_call(
            functools.partial(_pool_gate_kernel, s=s, s_tile=s_tile, n_s=n_s,
                              inv_s=inv_s),
            out_shape=jax.ShapeDtypeStruct((b, c, 1), x.dtype),
            grid=(b, n_s),
            in_specs=[
                pl.BlockSpec(w1t.shape, lambda i, k: (0, 0)),
                pl.BlockSpec(b1r.shape, lambda i, k: (0, 0)),
                pl.BlockSpec(w2m.shape, lambda i, k: (0, 0)),
                pl.BlockSpec(b2c.shape, lambda i, k: (0, 0)),
                pl.BlockSpec((None, c, s_tile), lambda i, k: (i, 0, k)),
            ],
            out_specs=pl.BlockSpec((None, c, 1), lambda i, k: (i, 0, 0)),
            scratch_shapes=[pltpu.VMEM((c, LANE), jnp.float32)],
            compiler_params=pltpu.CompilerParams(
                dimension_semantics=("parallel", "arbitrary"),
                vmem_limit_bytes=VMEM_LIMIT_BYTES),
            cost_estimate=pl.CostEstimate(
                flops=b * c * s, transcendentals=b * c,
                bytes_accessed=x_bytes + b * c * itemsize),
        )(w1t, b1r, w2m, b2c, x_flat)

        # ---- pass 2: streaming channel-wise rescale -------------------------
        out_flat = pl.pallas_call(
            _scale_kernel,
            out_shape=jax.ShapeDtypeStruct((b, c, s), x.dtype),
            grid=(b, n_s),
            in_specs=[
                pl.BlockSpec((None, c, 1), lambda i, k: (i, 0, 0)),
                pl.BlockSpec((None, c, s_tile), lambda i, k: (i, 0, k)),
            ],
            out_specs=pl.BlockSpec((None, c, s_tile), lambda i, k: (i, 0, k)),
            compiler_params=pltpu.CompilerParams(
                dimension_semantics=("parallel", "parallel"),
                vmem_limit_bytes=VMEM_LIMIT_BYTES),
            cost_estimate=pl.CostEstimate(
                flops=b * c * s, transcendentals=0,
                bytes_accessed=2 * x_bytes),
        )(gate, x_flat)

    return out_flat.reshape(b, c, d, hh, ww)


def init_params(key, channel=32, divide=4):
    """Deterministic nn.Linear-style init (uniform +-1/sqrt(fan_in))."""
    hidden = channel // divide
    k1, k2, k3, k4 = jax.random.split(key, 4)
    lim1 = 1.0 / jnp.sqrt(channel)
    lim2 = 1.0 / jnp.sqrt(hidden)
    w1 = jax.random.uniform(k1, (hidden, channel), jnp.float32, -lim1, lim1)
    b1 = jax.random.uniform(k2, (hidden,), jnp.float32, -lim1, lim1)
    w2 = jax.random.uniform(k3, (channel, hidden), jnp.float32, -lim2, lim2)
    b2 = jax.random.uniform(k4, (channel,), jnp.float32, -lim2, lim2)
    return w1, b1, w2, b2


def _reference(x, w1, b1, w2, b2):
    pooled = jnp.mean(x, axis=(2, 3, 4))
    hid = jnp.maximum(pooled @ w1.T + b1, 0.0)
    gate = 1.0 / (1.0 + jnp.exp(-(hid @ w2.T + b2)))
    return gate[:, :, None, None, None] * x


if __name__ == "__main__":
    channel, divide = 32, 4
    key = jax.random.PRNGKey(0)
    kp, k1, k2, k3 = jax.random.split(key, 4)
    w1, b1, w2, b2 = init_params(kp, channel, divide)

    # 1) fused single-pass path, spatial extent not a multiple of 128 (S = 64)
    x1 = jax.random.normal(k1, (2, channel, 4, 4, 4), jnp.float32)
    o1 = am_forward(x1, w1, b1, w2, b2)
    jax.block_until_ready(o1)
    assert jnp.allclose(o1, _reference(x1, w1, b1, w2, b2), atol=1e-5, rtol=1e-5), \
        "mismatch (fused, ragged S)"

    # 2) fused single-pass path, larger lane-aligned extent (S = 2048)
    x2 = jax.random.normal(k2, (2, channel, 16, 8, 16), jnp.float32)
    o2 = am_forward(x2, w1, b1, w2, b2)
    jax.block_until_ready(o2)
    assert jnp.allclose(o2, _reference(x2, w1, b1, w2, b2), atol=1e-5, rtol=1e-5), \
        "mismatch (fused, aligned S)"

    # 3) force the two-pass tiled path with a ragged tail (S = 360, tile = 128,
    #    3 spatial tiles, last one masked) at small shapes.
    x3 = jax.random.normal(k3, (2, channel, 6, 6, 10), jnp.float32)
    o3 = am_forward(x3, w1, b1, w2, b2,
                    fused_max_bytes=0, tile_target_bytes=16 * 1024)
    jax.block_until_ready(o3)
    assert jnp.allclose(o3, _reference(x3, w1, b1, w2, b2), atol=1e-5, rtol=1e-5), \
        "mismatch (two-pass, ragged tail)"

    print("KERNEL_OK")
</pallas_src>

<mosaic_0001>
module attributes {stable_mosaic.version = 11 : i64} {
  func.func @_fused_kernel(%arg0: i32, %arg1: memref<32x8xf32, #tpu.memory_space<vmem>>, %arg2: memref<1x8xf32, #tpu.memory_space<vmem>>, %arg3: memref<32x8xf32, #tpu.memory_space<vmem>>, %arg4: memref<32x1xf32, #tpu.memory_space<vmem>>, %arg5: memref<1x32x64xf32, #tpu.memory_space<vmem>>, %arg6: memref<1x32x64xf32, #tpu.memory_space<vmem>>) attributes {dimension_semantics = [#tpu.dimension_semantics<parallel>], iteration_bounds = array<i64: 2>, scalar_prefetch = 0 : i64, scratch_operands = 0 : i64, tpu.core_type = #tpu.core_type<tc>, window_params = [{pipeline_mode = #tpu.pipeline_mode<synchronous>, transform_indices = @transform_0, window_bounds = array<i64: 32, 8>}, {pipeline_mode = #tpu.pipeline_mode<synchronous>, transform_indices = @transform_1, window_bounds = array<i64: 1, 8>}, {pipeline_mode = #tpu.pipeline_mode<synchronous>, transform_indices = @transform_2, window_bounds = array<i64: 32, 8>}, {pipeline_mode = #tpu.pipeline_mode<synchronous>, transform_indices = @transform_3, window_bounds = array<i64: 32, 1>}, {transform_indices = @transform_4, window_bounds = array<i64: 1, 32, 64>}, {transform_indices = @transform_5, window_bounds = array<i64: 1, 32, 64>}]} {
    %c0 = arith.constant 0 : index
    %c0_0 = arith.constant 0 : index
    %c0_1 = arith.constant 0 : index
    %0 = vector.load %arg5[%c0, %c0_0, %c0_1] : memref<1x32x64xf32, #tpu.memory_space<vmem>>, vector<1x32x64xf32>
    %1 = vector.shape_cast %0 : vector<1x32x64xf32> to vector<32x64xf32>
    %cst = arith.constant dense<0.000000e+00> : vector<32xf32>
    %2 = vector.multi_reduction <add>, %1, %cst [1] : vector<32x64xf32> to vector<32xf32>
    %3 = vector.shape_cast %2 : vector<32xf32> to vector<32x1xf32>
    %cst_2 = arith.constant 1.562500e-02 : f32
    %4 = vector.broadcast %cst_2 : f32 to vector<32x1xf32>
    %5 = arith.mulf %3, %4 : vector<32x1xf32>
    %c0_3 = arith.constant 0 : index
    %c0_4 = arith.constant 0 : index
    %6 = vector.load %arg1[%c0_3, %c0_4] : memref<32x8xf32, #tpu.memory_space<vmem>>, vector<32x8xf32>
    %c0_5 = arith.constant 0 : index
    %c0_6 = arith.constant 0 : index
    %7 = vector.load %arg2[%c0_5, %c0_6] : memref<1x8xf32, #tpu.memory_space<vmem>>, vector<1x8xf32>
    %c0_7 = arith.constant 0 : index
    %c0_8 = arith.constant 0 : index
    %8 = vector.load %arg3[%c0_7, %c0_8] : memref<32x8xf32, #tpu.memory_space<vmem>>, vector<32x8xf32>
    %c0_9 = arith.constant 0 : index
    %c0_10 = arith.constant 0 : index
    %9 = vector.load %arg4[%c0_9, %c0_10] : memref<32x1xf32, #tpu.memory_space<vmem>>, vector<32x1xf32>
    %10 = vector.broadcast %5 : vector<32x1xf32> to vector<32x8xf32>
    %11 = arith.mulf %6, %10 : vector<32x8xf32>
    %cst_11 = arith.constant dense<0.000000e+00> : vector<8xf32>
    %12 = vector.multi_reduction <add>, %11, %cst_11 [0] : vector<32x8xf32> to vector<8xf32>
    %13 = vector.shape_cast %12 : vector<8xf32> to vector<1x8xf32>
    %14 = arith.addf %13, %7 : vector<1x8xf32>
    %cst_12 = arith.constant 0.000000e+00 : f32
    %15 = vector.broadcast %cst_12 : f32 to vector<1x8xf32>
    %16 = arith.maximumf %14, %15 : vector<1x8xf32>
    %17 = vector.broadcast %16 : vector<1x8xf32> to vector<32x8xf32>
    %18 = arith.mulf %8, %17 : vector<32x8xf32>
    %cst_13 = arith.constant dense<0.000000e+00> : vector<32xf32>
    %19 = vector.multi_reduction <add>, %18, %cst_13 [1] : vector<32x8xf32> to vector<32xf32>
    %20 = vector.shape_cast %19 : vector<32xf32> to vector<32x1xf32>
    %21 = arith.addf %20, %9 : vector<32x1xf32>
    %cst_14 = arith.constant 0.000000e+00 : f32
    %22 = vector.broadcast %cst_14 : f32 to vector<32x1xf32>
    %23 = arith.subf %22, %21 : vector<32x1xf32>
    %24 = math.exp %23 : vector<32x1xf32>
    %cst_15 = arith.constant 1.000000e+00 : f32
    %25 = vector.broadcast %cst_15 : f32 to vector<32x1xf32>
    %26 = arith.addf %25, %24 : vector<32x1xf32>
    %cst_16 = arith.constant 1.000000e+00 : f32
    %27 = vector.broadcast %cst_16 : f32 to vector<32x1xf32>
    %28 = arith.divf %27, %26 : vector<32x1xf32>
    %29 = vector.broadcast %28 : vector<32x1xf32> to vector<32x64xf32>
    %30 = arith.mulf %1, %29 : vector<32x64xf32>
    %c0_17 = arith.constant 0 : index
    %c0_18 = arith.constant 0 : index
    %c0_19 = arith.constant 0 : index
    %31 = vector.load %arg6[%c0_17, %c0_18, %c0_19] : memref<1x32x64xf32, #tpu.memory_space<vmem>>, vector<1x32x64xf32>
    %32 = vector.shape_cast %31 : vector<1x32x64xf32> to vector<32x64xf32>
    %33 = vector.shape_cast %30 : vector<32x64xf32> to vector<1x32x64xf32>
    tpu.vector_store %arg6[%c0_17, %c0_18, %c0_19], %33 {strides = array<i32>} : memref<1x32x64xf32, #tpu.memory_space<vmem>>, vector<1x32x64xf32>,
    return
  }
  func.func @transform_0(%arg0: i32) -> (i32, i32) {
    %c0_i32 = arith.constant 0 : i32
    %c0_i32_0 = arith.constant 0 : i32
    %c0_i32_1 = arith.constant 0 : i32
    return %c0_i32, %c0_i32_0 : i32, i32
  }
  func.func @transform_1(%arg0: i32) -> (i32, i32) {
    %c0_i32 = arith.constant 0 : i32
    %c0_i32_0 = arith.constant 0 : i32
    %c0_i32_1 = arith.constant 0 : i32
    return %c0_i32, %c0_i32_0 : i32, i32
  }
  func.func @transform_2(%arg0: i32) -> (i32, i32) {
    %c0_i32 = arith.constant 0 : i32
    %c0_i32_0 = arith.constant 0 : i32
    %c0_i32_1 = arith.constant 0 : i32
    return %c0_i32, %c0_i32_0 : i32, i32
  }
  func.func @transform_3(%arg0: i32) -> (i32, i32) {
    %c0_i32 = arith.constant 0 : i32
    %c0_i32_0 = arith.constant 0 : i32
    %c0_i32_1 = arith.constant 0 : i32
    return %c0_i32, %c0_i32_0 : i32, i32
  }
  func.func @transform_4(%arg0: i32) -> (i32, i32, i32) {
    %c0_i32 = arith.constant 0 : i32
    %c0_i32_0 = arith.constant 0 : i32
    %c0_i32_1 = arith.constant 0 : i32
    return %arg0, %c0_i32, %c0_i32_0 : i32, i32, i32
  }
  func.func @transform_5(%arg0: i32) -> (i32, i32, i32) {
    %c0_i32 = arith.constant 0 : i32
    %c0_i32_0 = arith.constant 0 : i32
    %c0_i32_1 = arith.constant 0 : i32
    return %arg0, %c0_i32, %c0_i32_0 : i32, i32, i32
  }
}

</mosaic_0001>

<llo_original>
// kernel: tpu_custom_call.1
$region0: #{tpu_custom_call.1}
  #allocation0 [shape = 'u32[]', space=smem, size = 0x4, offset = 0x4, fixed_abs, tag = 'smem constant byte address 0x4 - core index']
  #allocation1 [shape = 'u32[144,128]{1,0:T(1,128)}', space=vmem, size = 0x12000, scoped, tag = 'internal scratch']
  %s0 = inlined_call_operand.vmem [shape: f32[32,8], index: 0, kind: input, shape index: {}]
  %s1 = inlined_call_operand.vmem [shape: f32[1,8], index: 1, kind: input, shape index: {}]
  %s2 = inlined_call_operand.vmem [shape: f32[32,8], index: 2, kind: input, shape index: {}]
  %s3 = inlined_call_operand.vmem [shape: f32[32,1], index: 3, kind: input, shape index: {}]
  %s4 = inlined_call_operand.vmem [shape: f32[2,32,64], index: 4, kind: input, shape index: {}]
  %s5 = inlined_call_operand.hbm [shape: f32[2,32,64], index: 5, kind: output, shape index: {}]
  %s6 = sld [smem:[#allocation0]]
  $region53: #{tpu_custom_call.1} parent=0
    _
  %s8 = ssub.s32 1, %s6
  %s9 = scalar_select 0, %s8, %s6
  $region1: #{tpu_custom_call.1} parent=0
    #allocation2 [shape = 'u8[32768]{0}', space=vmem, size = 0x8000, scoped, tag = 'output window, operand 0']
    #allocation3 [shape = 's32[2]{0}', space=sflag, size = 0x8, scoped, tag = 'scoped memory for tpu_custom_call.1']
    %10 = vsyncpa [#allocation3], 0
    %s11 = scalar_lea.sflag [#allocation3], 1
    %12 = vsyncpa %s11, 0
    loop: start=0, step=1, limit=4
    $region2: #{tpu_custom_call.1} parent=1 // loop_pre_header
      _
    $region3: #{tpu_custom_call.1} parent=1 // loop_header
      %s14 = sphi 0, %s18
      %p15 = scmp.ge.s32.totalorder %s14, 4
      %s22 = sphi 0, %s22
      %s24 = sphi 0, %s22
      %s25 = sphi 0, %s24
      %s39 = sphi 0, %s25
      %s43 = sphi 0, %s43
      %s45 = sphi 0, %s43
      %s46 = sphi 0, %s45
      %s60 = sphi 0, %s46
      %s64 = sphi 0, %s64
      %s66 = sphi 0, %s64
      %s67 = sphi 0, %s66
      %s81 = sphi 0, %s67
      %s85 = sphi 0, %s85
      %s87 = sphi 0, %s85
      %s88 = sphi 0, %s87
      %s102 = sphi 0, %s88
      %s108 = sphi 0, %s110
      %s111 = sphi 0, %s108
      %s112 = sphi 0, %s111
      %s128 = sphi 0, %s112
      %s134 = sphi 0, %s136
      %s137 = sphi 0, %s134
      %s138 = sphi 0, %s137
      %s154 = sphi 0, %s138
    $region4: #{tpu_custom_call.1} parent=1 // loop_header_branch
      %17 = sbr.rel (%p15) target = $region8
    $region5: #{tpu_custom_call.1} parent=1 // loop_body
      %s19 = ssub.s32 %s14, 1
      %s20 = ssub.s32 %s14, 2
      %s21 = sadd.s32 %s14, 1
      %s23 = sadd.s32 %s22, 1
      %p26 = scmp.eq.s32.totalorder %s14, 1
      %p27 = scmp.ne.s32.totalorder %s22, %s24
      %p28 = scmp.eq.s32.totalorder %s14, 0
      %p29 = por %p27, %p28
      %p30 = scmp.ne.s32.totalorder %s22, %s24
      %p31 = scmp.eq.s32.totalorder %s19, 1
      %p32 = por %p30, %p31
      %p33 = scmp.ne.s32.totalorder %s24, %s25
      %p34 = scmp.eq.s32.totalorder %s19, 0
      %p35 = por %p33, %p34
      %p36 = scmp.ne.s32.totalorder %s24, %s25
      %p37 = scmp.eq.s32.totalorder %s20, 1
      %p38 = por %p36, %p37
      %p40 = scmp.ne.s32.totalorder %s25, %s39
      %p41 = scmp.eq.s32.totalorder %s20, 0
      %p42 = por %p40, %p41
      %s44 = sadd.s32 %s43, 1
      %p47 = scmp.eq.s32.totalorder %s14, 1
      %p48 = scmp.ne.s32.totalorder %s43, %s45
      %p49 = scmp.eq.s32.totalorder %s14, 0
      %p50 = por %p48, %p49
      %p51 = scmp.ne.s32.totalorder %s43, %s45
      %p52 = scmp.eq.s32.totalorder %s19, 1
      %p53 = por %p51, %p52
      %p54 = scmp.ne.s32.totalorder %s45, %s46
      %p55 = scmp.eq.s32.totalorder %s19, 0
      %p56 = por %p54, %p55
      %p57 = scmp.ne.s32.totalorder %s45, %s46
      %p58 = scmp.eq.s32.totalorder %s20, 1
      %p59 = por %p57, %p58
      %p61 = scmp.ne.s32.totalorder %s46, %s60
      %p62 = scmp.eq.s32.totalorder %s20, 0
      %p63 = por %p61, %p62
      %s65 = sadd.s32 %s64, 1
      %p68 = scmp.eq.s32.totalorder %s14, 1
      %p69 = scmp.ne.s32.totalorder %s64, %s66
      %p70 = scmp.eq.s32.totalorder %s14, 0
      %p71 = por %p69, %p70
      %p72 = scmp.ne.s32.totalorder %s64, %s66
      %p73 = scmp.eq.s32.totalorder %s19, 1
      %p74 = por %p72, %p73
      %p75 = scmp.ne.s32.totalorder %s66, %s67
      %p76 = scmp.eq.s32.totalorder %s19, 0
      %p77 = por %p75, %p76
      %p78 = scmp.ne.s32.totalorder %s66, %s67
      %p79 = scmp.eq.s32.totalorder %s20, 1
      %p80 = por %p78, %p79
      %p82 = scmp.ne.s32.totalorder %s67, %s81
      %p83 = scmp.eq.s32.totalorder %s20, 0
      %p84 = por %p82, %p83
      %s86 = sadd.s32 %s85, 1
      %p89 = scmp.eq.s32.totalorder %s14, 1
      %p90 = scmp.ne.s32.totalorder %s85, %s87
      %p91 = scmp.eq.s32.totalorder %s14, 0
      %p92 = por %p90, %p91
      %p93 = scmp.ne.s32.totalorder %s85, %s87
      %p94 = scmp.eq.s32.totalorder %s19, 1
      %p95 = por %p93, %p94
      %p96 = scmp.ne.s32.totalorder %s87, %s88
      %p97 = scmp.eq.s32.totalorder %s19, 0
      %p98 = por %p96, %p97
      %p99 = scmp.ne.s32.totalorder %s87, %s88
      %p100 = scmp.eq.s32.totalorder %s20, 1
      %p101 = por %p99, %p100
      %p103 = scmp.ne.s32.totalorder %s88, %s102
      %p104 = scmp.eq.s32.totalorder %s20, 0
      %p105 = por %p103, %p104
      %s106 = ssub.s32 %s14, %s21
      %p107 = scmp.eq.s32.totalorder %s106, 0
      %s109 = sadd.s32 %s108, 1
      %s110 = scalar_select %p107, %s108, %s109
      %p113 = pneg %p107
      %p114 = scmp.eq.s32.totalorder %s14, 1
      %p115 = por %p113, %p114
      %p116 = scmp.ne.s32.totalorder %s108, %s111
      %p117 = scmp.eq.s32.totalorder %s14, 0
      %p118 = por %p116, %p117
      %p119 = scmp.ne.s32.totalorder %s108, %s111
      %p120 = scmp.eq.s32.totalorder %s19, 1
      %p121 = por %p119, %p120
      %p122 = scmp.ne.s32.totalorder %s111, %s112
      %p123 = scmp.eq.s32.totalorder %s19, 0
      %p124 = por %p122, %p123
      %p125 = scmp.ne.s32.totalorder %s111, %s112
      %p126 = scmp.eq.s32.totalorder %s20, 1
      %p127 = por %p125, %p126
      %p129 = scmp.ne.s32.totalorder %s112, %s128
      %p130 = scmp.eq.s32.totalorder %s20, 0
      %p131 = por %p129, %p130
      %s132 = ssub.s32 %s14, %s21
      %p133 = scmp.eq.s32.totalorder %s132, 0
      %s135 = sadd.s32 %s134, 1
      %s136 = scalar_select %p133, %s134, %s135
      %p139 = pneg %p133
      %p140 = scmp.eq.s32.totalorder %s14, 1
      %p141 = por %p139, %p140
      %p142 = scmp.ne.s32.totalorder %s134, %s137
      %p143 = scmp.eq.s32.totalorder %s14, 0
      %p144 = por %p142, %p143
      %p145 = scmp.ne.s32.totalorder %s134, %s137
      %p146 = scmp.eq.s32.totalorder %s19, 1
      %p147 = por %p145, %p146
      %p148 = scmp.ne.s32.totalorder %s137, %s138
      %p149 = scmp.eq.s32.totalorder %s19, 0
      %p150 = por %p148, %p149
      %p151 = scmp.ne.s32.totalorder %s137, %s138
      %p152 = scmp.eq.s32.totalorder %s20, 1
      %p153 = por %p151, %p152
      %p155 = scmp.ne.s32.totalorder %s138, %s154
      %p156 = scmp.eq.s32.totalorder %s20, 0
      %p157 = por %p155, %p156
      %p158 = scmp.le.s32.totalorder 1, %s14
      %p159 = scmp.lt.s32.totalorder %s14, 3
      %p160 = pnand %p158, %p159
      %p161 = pneg %p160
      // Predicated region
      $region9: #{tpu_custom_call.1} parent=5 // pred_check
        _
      $region10: #{tpu_custom_call.1} parent=5 // pred_check_branch
        %163 = sbr.rel (%p160) target = $region12
      $region11: #{tpu_custom_call.1} parent=5 // pred_region
        %s164 = ssub.s32 %s14, 1
        // Predicated region
        $region13: #{tpu_custom_call.1} parent=11 // pred_check
          %p165 = pneg %p35
        $region14: #{tpu_custom_call.1} parent=11 // pred_check_branch
          %167 = sbr.rel (%p165) target = $region16
        $region15: #{tpu_custom_call.1} parent=11 // pred_region
          _
        $region16: #{tpu_custom_call.1} parent=11 // pred_fallthru
          _
        // Predicated region
        $region17: #{tpu_custom_call.1} parent=11 // pred_check
          %p168 = pneg %p56
        $region18: #{tpu_custom_call.1} parent=11 // pred_check_branch
          %170 = sbr.rel (%p168) target = $region20
        $region19: #{tpu_custom_call.1} parent=11 // pred_region
          _
        $region20: #{tpu_custom_call.1} parent=11 // pred_fallthru
          _
        // Predicated region
        $region21: #{tpu_custom_call.1} parent=11 // pred_check
          %p171 = pneg %p77
        $region22: #{tpu_custom_call.1} parent=11 // pred_check_branch
          %173 = sbr.rel (%p171) target = $region24
        $region23: #{tpu_custom_call.1} parent=11 // pred_region
          _
        $region24: #{tpu_custom_call.1} parent=11 // pred_fallthru
          _
        // Predicated region
        $region25: #{tpu_custom_call.1} parent=11 // pred_check
          %p174 = pneg %p98
        $region26: #{tpu_custom_call.1} parent=11 // pred_check_branch
          %176 = sbr.rel (%p174) target = $region28
        $region27: #{tpu_custom_call.1} parent=11 // pred_region
          _
        $region28: #{tpu_custom_call.1} parent=11 // pred_fallthru
          _
      $region12: #{tpu_custom_call.1} parent=5 // pred_fallthru
        _
      %p177 = scmp.lt.s32.totalorder %s14, 2
      // Predicated region
      $region29: #{tpu_custom_call.1} parent=5 // pred_check
        %p178 = pneg %p177
      $region30: #{tpu_custom_call.1} parent=5 // pred_check_branch
        %180 = sbr.rel (%p178) target = $region32
      $region31: #{tpu_custom_call.1} parent=5 // pred_region
        // Predicated region
        $region33: #{tpu_custom_call.1} parent=31 // pred_check
          %p181 = pneg %p118
        $region34: #{tpu_custom_call.1} parent=31 // pred_check_branch
          %183 = sbr.rel (%p181) target = $region36
        $region35: #{tpu_custom_call.1} parent=31 // pred_region
          %p184 = scmp.lt.s32.totalorder %s14, 1
          %s185 = scalar_select %p184, %s14, 1
          %s186 = smul.addr %s185, 4
          %s187 = smul.addr %s186, 8
          %s188 = scalar_lea.vmem %s4, %s187
        $region36: #{tpu_custom_call.1} parent=31 // pred_fallthru
          _
      $region32: #{tpu_custom_call.1} parent=5 // pred_fallthru
        _
      %p189 = scmp.le.s32.totalorder 1, %s14
      %p190 = scmp.lt.s32.totalorder %s14, 3
      %p191 = pnand %p189, %p190
      %p192 = pneg %p191
      // Predicated region
      $region37: #{tpu_custom_call.1} parent=5 // pred_check
        _
      $region38: #{tpu_custom_call.1} parent=5 // pred_check_branch
        %194 = sbr.rel (%p191) target = $region40
      $region39: #{tpu_custom_call.1} parent=5 // pred_region
        %s195 = ssub.s32 %s14, 1
        %p196 = pneg %p35
        %p197 = pneg %p32
        %p198 = pneg %p56
        %p199 = pneg %p53
        %p200 = pneg %p77
        %p201 = pneg %p74
        %p202 = pneg %p98
        %p203 = pneg %p95
        %p204 = scmp.lt.s32.totalorder %s19, 1
        %s205 = scalar_select %p204, %s19, 1
        %s206 = smul.addr %s205, 4
        %s207 = smul.addr %s206, 8
        %s208 = scalar_lea.vmem %s4, %s207
        %p209 = pneg %p124
        %p210 = pneg %p121
        %p211 = pneg %p150
        %p212 = pneg %p147
        %s213 = sand.u32 %s137, 1
        %s214 = scalar_lea.sflag [#allocation3], %s213
        %s215 = sand.u32 %s137, 1
        %s216 = smul.addr %s215, 32
        %s217 = scalar_lea.vmem [#allocation2], %s216
        %p218 = scmp.lt.s32.totalorder %s19, 1
        %s219 = scalar_select %p218, %s19, 1
        %s220 = smul.addr %s219, 4
        %s221 = smul.addr %s220, 8
        %s222 = scalar_lea.vmem %s4, %s221
        %v223 = vld [vmem:[%s222] sm:$0xff]
        %v224 = vld [vmem:[%s222 + $0x8] sm:$0xff]
        %v225 = vld [vmem:[%s222 + $0x10] sm:$0xff]
        %v226 = vld [vmem:[%s222 + $0x18] sm:$0xff]
        %vm227 = vcmask 523264
        %v228 = vsel %vm227, %v223, 0.0
        %229 = vadd.xlane.f32.xlu0 %v228
        %v230 = vpop.xlane.xlu0 %229
        %v231 = vsel %vm227, %v224, 0.0
        %232 = vadd.xlane.f32.xlu0 %v231
        %v233 = vpop.xlane.xlu0 %232
        %v234 = vsel %vm227, %v225, 0.0
        %235 = vadd.xlane.f32.xlu0 %v234
        %v236 = vpop.xlane.xlu0 %235
        %v237 = vsel %vm227, %v226, 0.0
        %238 = vadd.xlane.f32.xlu0 %v237
        %v239 = vpop.xlane.xlu0 %238
        %v240 = vmul.f32 %v230, 0.015625
        %v241 = vmul.f32 %v233, 0.015625
        %v242 = vmul.f32 %v236, 0.015625
        %v243 = vmul.f32 %v239, 0.015625
        %v244 = vld [vmem:[%s0] sm:$0xff]
        %v245 = vld [vmem:[%s0 + $0x8] sm:$0xff]
        %v246 = vld [vmem:[%s0 + $0x10] sm:$0xff]
        %v247 = vld [vmem:[%s0 + $0x18] sm:$0xff]
        %v248 = vld [vmem:[%s1] sm:$0x1]
        %v249 = vld [vmem:[%s2] sm:$0xff]
        %v250 = vld [vmem:[%s2 + $0x8] sm:$0xff]
        %v251 = vld [vmem:[%s2 + $0x10] sm:$0xff]
        %v252 = vld [vmem:[%s2 + $0x18] sm:$0xff]
        %v253 = vld [vmem:[%s3] sm:$0xff]
        %v254 = vld [vmem:[%s3 + $0x8] sm:$0xff]
        %v255 = vld [vmem:[%s3 + $0x10] sm:$0xff]
        %v256 = vld [vmem:[%s3 + $0x18] sm:$0xff]
        %v257 = vmul.f32 %v244, %v240
        %v258 = vmul.f32 %v245, %v241
        %v259 = vmul.f32 %v246, %v242
        %v260 = vmul.f32 %v247, %v243
        %vm261 = vcmask 64512
        %v262 = vsel %vm261, %v257, 0.0
        %v263 = vsel %vm261, %v258, 0.0
        %v264 = vadd.f32 %v262, %v263
        %v265 = vsel %vm261, %v259, 0.0
        %v266 = vadd.f32 %v264, %v265
        %v267 = vsel %vm261, %v260, 0.0
        %v268 = vadd.f32 %v266, %v267
        %v269 = vrot.slane %v268, 4
        %v270 = vadd.f32 %v268, %v269
        %v271 = vrot.slane %v270, 2
        %v272 = vadd.f32 %v270, %v271
        %v273 = vrot.slane %v272, 1
        %v274 = vadd.f32 %v272, %v273
        %v275 = vadd.f32 %v274, %v248
        %v276 = vmax.f32 %v275, 0.0
        %v277 = vlaneseq
        %v278 = vshrl.u32 %v277, 7
        %v279 = vsub.s32 0, %v278
        %v280 = vrot.slane %v276, %v279
        %v281 = vmul.f32 %v249, %v280
        %v282 = vmul.f32 %v250, %v280
        %v283 = vmul.f32 %v251, %v280
        %v284 = vmul.f32 %v252, %v280
        %v285 = vsel %vm261, %v281, 0.0
        %286 = vadd.xlane.f32.xlu0 %v285
        %v287 = vpop.xlane.xlu0 %286
        %v288 = vsel %vm261, %v282, 0.0
        %289 = vadd.xlane.f32.xlu0 %v288
        %v290 = vpop.xlane.xlu0 %289
        %v291 = vsel %vm261, %v283, 0.0
        %292 = vadd.xlane.f32.xlu0 %v291
        %v293 = vpop.xlane.xlu0 %292
        %v294 = vsel %vm261, %v284, 0.0
        %295 = vadd.xlane.f32.xlu0 %v294
        %v296 = vpop.xlane.xlu0 %295
        %v297 = vadd.f32 %v287, %v253
        %v298 = vadd.f32 %v290, %v254
        %v299 = vadd.f32 %v293, %v255
        %v300 = vadd.f32 %v296, %v256
        %v301 = vsub.f32 0.0, %v297
        %v302 = vsub.f32 0.0, %v298
        %v303 = vsub.f32 0.0, %v299
        %v304 = vsub.f32 0.0, %v300
        %v305 = vmul.f32 %v301, 1.442695
        %v306 = vpow.pop %v305
        %v307 = vmul.f32 %v302, 1.442695
        %v308 = vpow.pop %v307
        %v309 = vmul.f32 %v303, 1.442695
        %v310 = vpow.pop %v309
        %v311 = vmul.f32 %v304, 1.442695
        %v312 = vpow.pop %v311
        %v313 = vadd.f32 %v306, 1.0
        %v314 = vadd.f32 %v308, 1.0
        %v315 = vadd.f32 %v310, 1.0
        %v316 = vadd.f32 %v312, 1.0
        %v317 = vrcp.pop %v313
        %v318 = vmul.f32 1.0, %v317
        %v319 = vrcp.pop %v314
        %v320 = vmul.f32 1.0, %v319
        %v321 = vrcp.pop %v315
        %v322 = vmul.f32 1.0, %v321
        %v323 = vrcp.pop %v316
        %v324 = vmul.f32 1.0, %v323
        %326 = vset.pattern.permute.xlu0 0
        %327 = vperm.xlu0 %326, %v318
        %v328 = vpop.permute.xlu0 %327
        %331 = vset.pattern.permute.xlu0 0
        %332 = vperm.xlu0 %331, %v320
        %v333 = vpop.permute.xlu0 %332
        %336 = vset.pattern.permute.xlu0 0
        %337 = vperm.xlu0 %336, %v322
        %v338 = vpop.permute.xlu0 %337
        %341 = vset.pattern.permute.xlu0 0
        %342 = vperm.xlu0 %341, %v324
        %v343 = vpop.permute.xlu0 %342
        %v345 = vmul.f32 %v223, %v328
        %v346 = vmul.f32 %v224, %v333
        %v347 = vmul.f32 %v225, %v338
        %v348 = vmul.f32 %v226, %v343
        %349 = vst.msk [vmem:[%s217] sm:$0xff] %vm227, %v345
        %350 = vst.msk [vmem:[%s217 + $0x8] sm:$0xff] %vm227, %v346
        %351 = vst.msk [vmem:[%s217 + $0x10] sm:$0xff] %vm227, %v347
        %352 = vst.msk [vmem:[%s217 + $0x18] sm:$0xff] %vm227, %v348
        %s353 = sand.u32 %s137, 1
        %s354 = scalar_lea.sflag [#allocation3], %s353
        %s355 = sand.u32 %s137, 1
        %s356 = smul.addr %s355, 32
        %s357 = scalar_lea.vmem [#allocation2], %s356
        // Predicated region
        $region41: #{tpu_custom_call.1} parent=39 // pred_check
          %p358 = pneg %p147
        $region42: #{tpu_custom_call.1} parent=39 // pred_check_branch
          %360 = sbr.rel (%p358) target = $region44
        $region43: #{tpu_custom_call.1} parent=39 // pred_region
          %s362 = ssub.s32 512, 512
          %363 = vsyncadd %s354, %s362
          %s364 = smul.addr %s19, 4
          %s365 = smul.addr %s364, 128
          %s366 = scalar_lea.hbm %s5, %s365
          %s367 = sshll.u32 %s357, 4
          %s368 = int_to_ptr.vmem [resolvable:$true] %s367
          %373 = dma.vmem_to_hbm [thread:$0]  %s368, 512, %s366, %s354, 128, 128, 8
        $region44: #{tpu_custom_call.1} parent=39 // pred_fallthru
          _
      $region40: #{tpu_custom_call.1} parent=5 // pred_fallthru
        _
      %p374 = scmp.le.s32.totalorder 2, %s14
      // Predicated region
      $region45: #{tpu_custom_call.1} parent=5 // pred_check
        %p375 = pneg %p374
      $region46: #{tpu_custom_call.1} parent=5 // pred_check_branch
        %377 = sbr.rel (%p375) target = $region48
      $region47: #{tpu_custom_call.1} parent=5 // pred_region
        %s378 = ssub.s32 %s14, 2
        // Predicated region
        $region49: #{tpu_custom_call.1} parent=47 // pred_check
          %p379 = pneg %p153
        $region50: #{tpu_custom_call.1} parent=47 // pred_check_branch
          %381 = sbr.rel (%p379) target = $region52
        $region51: #{tpu_custom_call.1} parent=47 // pred_region
          %s382 = sand.u32 %s138, 1
          %s383 = scalar_lea.sflag [#allocation3], %s382
          %s384 = sand.u32 %s138, 1
          %s385 = smul.addr %s384, 32
          %s386 = scalar_lea.vmem [#allocation2], %s385
          %387 = dma.done %s383, 512
        $region52: #{tpu_custom_call.1} parent=47 // pred_fallthru
          _
      $region48: #{tpu_custom_call.1} parent=5 // pred_fallthru
        _
    $region6: #{tpu_custom_call.1} parent=1 // loop_footer
      %s18 = sadd.s32 1, %s14
    $region7: #{tpu_custom_call.1} parent=1 // loop_footer_branch
      %13 = sbr.rel target = $region3
    $region8: #{tpu_custom_call.1} parent=1 // loop_exit
      _
    %388 = vsyncpa [#allocation3], 1
    %s389 = scalar_lea.sflag [#allocation3], 1
    %390 = vsyncpa %s389, 1

</llo_original>
